<compile_context>
chip_gen: v7x
topology: tpu7x:2x2x1
jax: 0.10.0
libtpu: 0.0.40
codegen_flags: <defaults>
</compile_context>

<pallas_src>
import jax
import jax.numpy as jnp
from jax.experimental import pallas as pl
from jax.experimental.pallas import tpu as pltpu


def _round_up(x, m):
    return ((x + m - 1) // m) * m


def _patch_embed_kernel(x_ref, w_ref, b_ref, o_ref):
    # x_ref: (tm, K) bf16 patch tile   (streamed / double-buffered)
    # w_ref: (K, E_pad) bf16 weights   (VMEM-resident across the grid)
    # b_ref: (1, E_pad) f32 bias       (VMEM-resident)
    # o_ref: (tm, E_pad) output tile
    acc = jnp.dot(x_ref[...], w_ref[...], preferred_element_type=jnp.float32)
    o_ref[...] = (acc + b_ref[...]).astype(o_ref.dtype)


def patch_embed_matmul(patches, w, b, out_dtype=jnp.float32, tm_max=512):
    """patches: (M, K), w: (K, E), b: (E,)  ->  (M, E) = patches @ w + b."""
    M, K = patches.shape
    Kw, E = w.shape
    assert K == Kw, (K, Kw)

    # Lane-dense output: pad E to a multiple of 128 (kills masked stores,
    # fills MXU output columns).
    E_pad = _round_up(E, 128)
    # Row tile: multiple of 8 (sublane), capped so the working set
    # (resident weights + 2x input tile + 2x output tile) fits comfortably
    # even in v7x's 64 MiB VMEM.
    tm = min(tm_max, _round_up(M, 8))
    M_pad = _round_up(M, tm)

    # bf16 operands for the MXU (halves HBM bytes); bias stays f32, accumulate
    # is f32 via preferred_element_type so numerics match the f32 path closely.
    x_p = jnp.zeros((M_pad, K), jnp.bfloat16).at[:M, :].set(
        patches.astype(jnp.bfloat16))
    w_p = jnp.zeros((K, E_pad), jnp.bfloat16).at[:, :E].set(
        w.astype(jnp.bfloat16))
    b_p = jnp.zeros((1, E_pad), jnp.float32).at[:, :E].set(
        b.reshape(1, E).astype(jnp.float32))

    grid = (M_pad // tm,)
    flops = 2 * M_pad * K * E_pad
    bytes_accessed = M_pad * K * 2 + K * E_pad * 2 + M_pad * E_pad * 4

    out = pl.pallas_call(
        _patch_embed_kernel,
        out_shape=jax.ShapeDtypeStruct((M_pad, E_pad), out_dtype),
        grid_spec=pltpu.PrefetchScalarGridSpec(
            num_scalar_prefetch=0,
            grid=grid,
            in_specs=[
                # Patch rows stream through double-buffered (tm, K) tiles.
                pl.BlockSpec((tm, K), lambda i: (i, 0)),
                # Weights and bias pinned in VMEM across all grid steps.
                pl.BlockSpec((K, E_pad), lambda i: (0, 0)),
                pl.BlockSpec((1, E_pad), lambda i: (0, 0)),
            ],
            out_specs=pl.BlockSpec((tm, E_pad), lambda i: (i, 0)),
        ),
        compiler_params=pltpu.CompilerParams(
            dimension_semantics=("parallel",)),
        cost_estimate=pl.CostEstimate(
            flops=flops, transcendentals=0, bytes_accessed=bytes_accessed),
    )(x_p, w_p, b_p)

    return out[:M, :E]


class PatchEmbedPallas:
    """JAX/Pallas equivalent of the PyTorch PatchEmbed module (NCHW input)."""

    def __init__(self, img_size=16, patch_size=4, in_chans=4, embed_dim=32,
                 key=jax.random.PRNGKey(0), dtype=jnp.float32):
        self.img_size = img_size
        self.patch_size = patch_size
        self.in_chans = in_chans
        self.embed_dim = embed_dim
        self.grid_size = img_size // patch_size
        self.num_patches = self.grid_size * self.grid_size

        kw, kb = jax.random.split(key)
        # Same shapes as nn.Conv2d(in_chans, embed_dim, P, stride=P):
        #   weight (E, C, P, P), bias (E,).
        fan_in = in_chans * patch_size * patch_size
        bound = 1.0 / jnp.sqrt(fan_in)
        self.weight = jax.random.uniform(
            kw, (embed_dim, in_chans, patch_size, patch_size),
            minval=-bound, maxval=bound, dtype=dtype)
        self.bias = jax.random.uniform(
            kb, (embed_dim,), minval=-bound, maxval=bound, dtype=dtype)

    def __call__(self, x):
        # x: (B, C, H, W) NCHW, same as PyTorch.
        B, C, H, W = x.shape
        P = self.patch_size
        Hp, Wp = H // P, W // P
        E = self.embed_dim

        # Non-overlapping patch extraction:
        #   (B, C, Hp, P, Wp, P) -> (B, Hp, Wp, C, P, P) -> (B*Hp*Wp, C*P*P)
        # TODO(synk): for production-sized inputs keep activations NHWC so this
        # transpose becomes a pure reshape (or enable allow_input_fusion).
        patches = x.reshape(B, C, Hp, P, Wp, P)
        patches = jnp.transpose(patches, (0, 2, 4, 1, 3, 5))
        patches = patches.reshape(B * Hp * Wp, C * P * P)

        # Conv weight flattened to (C*P*P, E); (c, i, j) order matches the
        # patch flattening above.
        w2d = self.weight.reshape(E, C * P * P).T

        out = patch_embed_matmul(patches, w2d, self.bias, out_dtype=x.dtype)
        # Equivalent to proj(x).flatten(2).transpose(1, 2): (B, num_patches, E)
        return out.reshape(B, Hp * Wp, E)


if __name__ == "__main__":
    key = jax.random.PRNGKey(0)
    k_x, k_params = jax.random.split(key)

    # Small, consistent shapes: batch=2, in_chans=4, img=16, patch=4, embed=32
    B, C, H, W = 2, 4, 16, 16
    x = jax.random.normal(k_x, (B, C, H, W), dtype=jnp.float32)

    module = PatchEmbedPallas(img_size=H, patch_size=4, in_chans=C,
                              embed_dim=32, key=k_params)
    out = module(x)
    out = jax.block_until_ready(out)

    assert out.shape == (B, module.num_patches, module.embed_dim), out.shape
    assert jnp.all(jnp.isfinite(out))

    # Cross-check against a plain-JAX reference (bf16 operands, f32 accumulate).
    patches = x.reshape(B, C, H // 4, 4, W // 4, 4)
    patches = jnp.transpose(patches, (0, 2, 4, 1, 3, 5)).reshape(B * 16, C * 16)
    w2d = module.weight.reshape(32, C * 16).T
    ref = (jnp.dot(patches.astype(jnp.bfloat16), w2d.astype(jnp.bfloat16),
                   preferred_element_type=jnp.float32)
           + module.bias.reshape(1, 32)).reshape(B, 16, 32)
    assert jnp.allclose(out, ref, atol=1e-2, rtol=1e-2)

    print("KERNEL_OK")
</pallas_src>

<mosaic_0001>
module attributes {stable_mosaic.version = 11 : i64} {
  func.func @_patch_embed_kernel(%arg0: i32, %arg1: memref<32x64xbf16, #tpu.memory_space<vmem>>, %arg2: memref<64x128xbf16, #tpu.memory_space<vmem>>, %arg3: memref<1x128xf32, #tpu.memory_space<vmem>>, %arg4: memref<32x128xf32, #tpu.memory_space<vmem>>) attributes {dimension_semantics = [#tpu.dimension_semantics<parallel>], iteration_bounds = array<i64: 1>, scalar_prefetch = 0 : i64, scratch_operands = 0 : i64, tpu.core_type = #tpu.core_type<tc>, window_params = [{transform_indices = @transform_0, window_bounds = array<i64: 32, 64>}, {pipeline_mode = #tpu.pipeline_mode<synchronous>, transform_indices = @transform_1, window_bounds = array<i64: 64, 128>}, {pipeline_mode = #tpu.pipeline_mode<synchronous>, transform_indices = @transform_2, window_bounds = array<i64: 1, 128>}, {transform_indices = @transform_3, window_bounds = array<i64: 32, 128>}]} {
    %c0 = arith.constant 0 : index
    %c0_0 = arith.constant 0 : index
    %0 = vector.load %arg1[%c0, %c0_0] : memref<32x64xbf16, #tpu.memory_space<vmem>>, vector<32x64xbf16>
    %c0_1 = arith.constant 0 : index
    %c0_2 = arith.constant 0 : index
    %1 = vector.load %arg2[%c0_1, %c0_2] : memref<64x128xbf16, #tpu.memory_space<vmem>>, vector<64x128xbf16>
    %cst = arith.constant dense<0.000000e+00> : vector<32x128xf32>
    %2 = tpu.matmul %0, %1, %cst {dimension_numbers = #tpu.dot_dimension_numbers<[1], [0], [0], [1], [0, 0, 1, 1], [], []>} : vector<32x64xbf16>, vector<64x128xbf16>, vector<32x128xf32> -> vector<32x128xf32>
    %c0_3 = arith.constant 0 : index
    %c0_4 = arith.constant 0 : index
    %3 = vector.load %arg3[%c0_3, %c0_4] : memref<1x128xf32, #tpu.memory_space<vmem>>, vector<1x128xf32>
    %4 = vector.broadcast %3 : vector<1x128xf32> to vector<32x128xf32>
    %5 = arith.addf %2, %4 : vector<32x128xf32>
    %c0_5 = arith.constant 0 : index
    %c0_6 = arith.constant 0 : index
    %6 = vector.load %arg4[%c0_5, %c0_6] : memref<32x128xf32, #tpu.memory_space<vmem>>, vector<32x128xf32>
    tpu.vector_store %arg4[%c0_5, %c0_6], %5 {strides = array<i32>} : memref<32x128xf32, #tpu.memory_space<vmem>>, vector<32x128xf32>,
    return
  }
  func.func @transform_0(%arg0: i32) -> (i32, i32) {
    %c0_i32 = arith.constant 0 : i32
    %c0_i32_0 = arith.constant 0 : i32
    return %arg0, %c0_i32 : i32, i32
  }
  func.func @transform_1(%arg0: i32) -> (i32, i32) {
    %c0_i32 = arith.constant 0 : i32
    %c0_i32_0 = arith.constant 0 : i32
    %c0_i32_1 = arith.constant 0 : i32
    return %c0_i32, %c0_i32_0 : i32, i32
  }
  func.func @transform_2(%arg0: i32) -> (i32, i32) {
    %c0_i32 = arith.constant 0 : i32
    %c0_i32_0 = arith.constant 0 : i32
    %c0_i32_1 = arith.constant 0 : i32
    return %c0_i32, %c0_i32_0 : i32, i32
  }
  func.func @transform_3(%arg0: i32) -> (i32, i32) {
    %c0_i32 = arith.constant 0 : i32
    %c0_i32_0 = arith.constant 0 : i32
    return %arg0, %c0_i32 : i32, i32
  }
}

</mosaic_0001>

<llo_original>
// kernel: tpu_custom_call.1
$region0: #{tpu_custom_call.1}
  #allocation0 [shape = 'u32[]', space=smem, size = 0x4, offset = 0x4, fixed_abs, tag = 'smem constant byte address 0x4 - core index']
  #allocation1 [shape = 'u32[144,128]{1,0:T(1,128)}', space=vmem, size = 0x12000, scoped, tag = 'internal scratch']
  %s0 = inlined_call_operand.hbm [shape: bf16[32,64], index: 0, kind: input, shape index: {}]
  %s1 = inlined_call_operand.hbm [shape: bf16[64,128], index: 1, kind: input, shape index: {}]
  %s2 = inlined_call_operand.vmem [shape: f32[1,128], index: 2, kind: input, shape index: {}]
  %s3 = inlined_call_operand.hbm [shape: f32[32,128], index: 3, kind: output, shape index: {}]
  %s4 = sld [smem:[#allocation0]]
  $region30: #{tpu_custom_call.1} parent=0
    _
  %s6 = ssub.s32 1, %s4
  %s7 = scalar_select 0, %s6, %s4
  $region1: #{tpu_custom_call.1} parent=0
    #allocation2 [shape = 'u8[8192]{0}', space=vmem, size = 0x2000, scoped, tag = 'input window, operand 0, single buffered']
    #allocation3 [shape = 's32[1]{0}', space=sflag, size = 0x4, scoped, tag = 'scoped memory for tpu_custom_call.1']
    #allocation4 [shape = 's32[1]{0}', space=sflag, size = 0x4, scoped, tag = 'scoped memory for tpu_custom_call.1']
    #allocation5 [shape = 'u8[16384]{0}', space=vmem, size = 0x4000, scoped, tag = 'input window, operand 1, single buffered']
    #allocation6 [shape = 's32[1]{0}', space=sflag, size = 0x4, scoped, tag = 'scoped memory for tpu_custom_call.1']
    #allocation7 [shape = 'u8[16384]{0}', space=vmem, size = 0x4000, scoped, tag = 'output window, operand 0, single buffered']
    %8 = vsyncpa [#allocation3], 0
    %9 = vsyncpa [#allocation6], 0
    %10 = vsyncpa [#allocation4], 0
    // Predicated region
    $region2: #{tpu_custom_call.1} parent=1 // pred_check
      _
    $region3: #{tpu_custom_call.1} parent=1 // pred_check_branch
      %12 = sbr.rel (0) target = $region5
    $region4: #{tpu_custom_call.1} parent=1 // pred_region
      %s14 = ssub.s32 256, 256
      %15 = vsyncadd [#allocation3], %s14
      %s16 = sshll.u32 [#allocation2], 4
      %s17 = int_to_ptr.vmem [resolvable:$true] %s16
      %22 = dma.hbm_to_vmem [thread:$0]  %s0, 256, %s17, [#allocation3], 64, 64, 4
    $region5: #{tpu_custom_call.1} parent=1 // pred_fallthru
      _
    // Predicated region
    $region6: #{tpu_custom_call.1} parent=1 // pred_check
      _
    $region7: #{tpu_custom_call.1} parent=1 // pred_check_branch
      %24 = sbr.rel (0) target = $region9
    $region8: #{tpu_custom_call.1} parent=1 // pred_region
      %s26 = ssub.s32 512, 512
      %27 = vsyncadd [#allocation6], %s26
      %s28 = sshll.u32 [#allocation5], 4
      %s29 = int_to_ptr.vmem [resolvable:$true] %s28
      %34 = dma.hbm_to_vmem [thread:$0]  %s1, 512, %s29, [#allocation6], 64, 64, 4
    $region9: #{tpu_custom_call.1} parent=1 // pred_fallthru
      _
    // Predicated region
    $region10: #{tpu_custom_call.1} parent=1 // pred_check
      _
    $region11: #{tpu_custom_call.1} parent=1 // pred_check_branch
      %36 = sbr.rel (0) target = $region13
    $region12: #{tpu_custom_call.1} parent=1 // pred_region
      _
    $region13: #{tpu_custom_call.1} parent=1 // pred_fallthru
      _
    // Predicated region
    $region14: #{tpu_custom_call.1} parent=1 // pred_check
      _
    $region15: #{tpu_custom_call.1} parent=1 // pred_check_branch
      %38 = sbr.rel (0) target = $region17
    $region16: #{tpu_custom_call.1} parent=1 // pred_region
      %39 = dma.done [#allocation3], 256
    $region17: #{tpu_custom_call.1} parent=1 // pred_fallthru
      _
    // Predicated region
    $region18: #{tpu_custom_call.1} parent=1 // pred_check
      _
    $region19: #{tpu_custom_call.1} parent=1 // pred_check_branch
      %41 = sbr.rel (0) target = $region21
    $region20: #{tpu_custom_call.1} parent=1 // pred_region
      %42 = dma.done [#allocation6], 512
    $region21: #{tpu_custom_call.1} parent=1 // pred_fallthru
      _
    %v44 = vld [vmem:[#allocation2] sm:$0xf]
    %v45 = vld [vmem:[#allocation2 + $0x4] sm:$0xf]
    %v46 = vld [vmem:[#allocation2 + $0x8] sm:$0xf]
    %v47 = vld [vmem:[#allocation2 + $0xc] sm:$0xf]
    %v48 = vld [vmem:[#allocation5] sm:$0xf]
    %v49 = vld [vmem:[#allocation5 + $0x4] sm:$0xf]
    %v50 = vld [vmem:[#allocation5 + $0x8] sm:$0xf]
    %v51 = vld [vmem:[#allocation5 + $0xc] sm:$0xf]
    %v52 = vld [vmem:[#allocation5 + $0x10] sm:$0xf]
    %v53 = vld [vmem:[#allocation5 + $0x14] sm:$0xf]
    %v54 = vld [vmem:[#allocation5 + $0x18] sm:$0xf]
    %v55 = vld [vmem:[#allocation5 + $0x1c] sm:$0xf]
    %v56 = vld [vmem:[%s2] sm:$0x1]
    %v58 = vlaneseq
    %v59 = vshrl.u32 %v58, 7
    %v60 = vsub.s32 0, %v59
    %v61 = vrot.slane %v56, %v60
    %v67 = vunpack.c.l.b16 %v44
    %v68 = vunpack.c.l.b16 %v45
    %v69 = vunpack.c.l.b16 %v46
    %v70 = vunpack.c.l.b16 %v47
    %v71 = vpack.c.b16 %v68, %v67
    %v72 = vpack.c.b16 %v70, %v69
    %v81 = vunpack.c.l.b16 %v48
    %v82 = vunpack.c.l.b16 %v49
    %v83 = vunpack.c.l.b16 %v50
    %v84 = vunpack.c.l.b16 %v51
    %v85 = vunpack.c.l.b16 %v52
    %v86 = vunpack.c.l.b16 %v53
    %v87 = vunpack.c.l.b16 %v54
    %v88 = vunpack.c.l.b16 %v55
    %v89 = vpack.c.b16 %v82, %v81
    %v90 = vpack.c.b16 %v84, %v83
    %v91 = vpack.c.b16 %v86, %v85
    %v92 = vpack.c.b16 %v88, %v87
    %vm97 = vcmask 523264
    %v99 = vsel %vm97, %v71, 0
    %v102 = vsel %vm97, %v72, 0
    %104 = vmatprep.subr.bf16.mxu0 0
    %105 = vmatpush1.bf16.msra.mxu0 %v89
    %106 = vmatprep.subr.bf16.mxu0 0
    %107 = vmatpush1.bf16.msra.mxu0 %v90
    %108 = vmatprep.subr.bf16.mxu0 0
    %109 = vmatpush1.bf16.msra.mxu0 %v91
    %110 = vmatprep.subr.bf16.mxu0 0
    %111 = vmatpush1.bf16.msra.mxu0 %v92
    %112 = vmatprep.subr.bf16.mxu0 0
    %113 = vmatpush1.bf16.msra.mxu0 0
    %114 = vmatprep.subr.bf16.mxu0 0
    %115 = vmatpush1.bf16.msra.mxu0 0
    %116 = vmatprep.subr.bf16.mxu0 0
    %117 = vmatpush1.bf16.msra.mxu0 0
    %118 = vmatprep.subr.bf16.mxu0 0
    %119 = vmatpush1.bf16.msra.mxu0 0
    %120 = vmatprep.subr.bf16.mxu0 0
    %121 = vmatpush1.bf16.msra.mxu0 0
    %122 = vmatprep.subr.bf16.mxu0 0
    %123 = vmatpush1.bf16.msra.mxu0 0
    %124 = vmatprep.subr.bf16.mxu0 0
    %125 = vmatpush1.bf16.msra.mxu0 0
    %126 = vmatprep.subr.bf16.mxu0 0
    %127 = vmatpush1.bf16.msra.mxu0 0
    %128 = vmatprep.subr.bf16.mxu0 0
    %129 = vmatpush1.bf16.msra.mxu0 0
    %130 = vmatprep.subr.bf16.mxu0 0
    %131 = vmatpush1.bf16.msra.mxu0 0
    %132 = vmatprep.subr.bf16.mxu0 0
    %133 = vmatpush1.bf16.msra.mxu0 0
    %134 = vmatprep.subr.bf16.mxu0 0
    %135 = vmatpush1.bf16.msra.mxu0 0
    %136 = vmatprep.mubr.bf16.mxu0 0
    %137 = vmatmul.mubr.bf16.gmra.mrb[0].mxu0 %v99
    %v138 = vpop.f32.mrb[0].mxu0
    %v139 = vadd.f32 %v61, %v138
    %v140 = vpop.f32.mrb[0].mxu0
    %v141 = vpop.f32.mrb[0].mxu0
    %v142 = vadd.f32 %v61, %v141
    %v143 = vpop.f32.mrb[0].mxu0
    %144 = vmatprep.mubr.bf16.mxu0 0
    %145 = vmatmul.mubr.bf16.gmra.mrb[0].mxu0 %v102
    %v146 = vpop.f32.mrb[0].mxu0
    %v147 = vadd.f32 %v61, %v146
    %v148 = vpop.f32.mrb[0].mxu0
    %v149 = vpop.f32.mrb[0].mxu0
    %v150 = vadd.f32 %v61, %v149
    %v151 = vpop.f32.mrb[0].mxu0
    %152 = vdwg.mxu0
    %153 = vst [vmem:[#allocation7] sm:$0xff] %v139
    %154 = vst [vmem:[#allocation7 + $0x8] sm:$0xff] %v142
    %155 = vst [vmem:[#allocation7 + $0x10] sm:$0xff] %v147
    %156 = vst [vmem:[#allocation7 + $0x18] sm:$0xff] %v150
    // Predicated region
    $region22: #{tpu_custom_call.1} parent=1 // pred_check
      _
    $region23: #{tpu_custom_call.1} parent=1 // pred_check_branch
      %158 = sbr.rel (0) target = $region25
    $region24: #{tpu_custom_call.1} parent=1 // pred_region
      %s160 = ssub.s32 512, 512
      %161 = vsyncadd [#allocation4], %s160
      %s162 = sshll.u32 [#allocation7], 4
      %s163 = int_to_ptr.vmem [resolvable:$true] %s162
      %168 = dma.vmem_to_hbm [thread:$0]  %s163, 512, %s3, [#allocation4], 128, 128, 8
    $region25: #{tpu_custom_call.1} parent=1 // pred_fallthru
      _
    // Predicated region
    $region26: #{tpu_custom_call.1} parent=1 // pred_check
      _
    $region27: #{tpu_custom_call.1} parent=1 // pred_check_branch
      %170 = sbr.rel (0) target = $region29
    $region28: #{tpu_custom_call.1} parent=1 // pred_region
      %171 = dma.done [#allocation4], 512
    $region29: #{tpu_custom_call.1} parent=1 // pred_fallthru
      _
    %172 = vsyncpa [#allocation3], 1
    %173 = vsyncpa [#allocation6], 1
    %174 = vsyncpa [#allocation4], 1

</llo_original>
